<compile_context>
chip_gen: v5e
topology: v5e:2x2
jax: 0.10.0
libtpu: 0.0.40
codegen_flags: <defaults>
</compile_context>

<pallas_src>
import jax
import jax.numpy as jnp
from jax.experimental import pallas as pl
from jax.experimental.pallas import tpu as pltpu


def _round_up(x, m):
    return (x + m - 1) // m * m


def _pick_tm(n, tm_max=256):
    """Row tile: 8-sublane aligned, >=2 grid steps when possible (v7x megacore),
    capped at tm_max, and sized from cdiv(n, 2) so mid-range N doesn't pad to
    nearly-empty tiles."""
    if n <= 8:
        return 8
    return min(tm_max, _round_up(pl.cdiv(n, 2), 8))


def _vmem_limit_bytes(tm, K, Dp):
    """Scoped-VMEM request derived from the actual tiles, with headroom."""
    frames_tile = 2 * tm * K * 4      # double-buffered f32 input tile
    weight = 2 * K * Dp * 2           # bf16 weight (x2 headroom vs Buffered(1))
    bias = Dp * 4
    out_tile = 2 * tm * Dp * 2        # double-buffered bf16 output tile
    need = frames_tile + weight + bias + out_tile
    return min(max(2 * need, 32 << 20), 64 << 20)


def linear_relu_kernel(x_ref, w_ref, b_ref, o_ref):
    """One (tm, D_pad) output tile: relu(x @ w + b).

    Frames arrive f32 and are cast to bf16 here (fused, no extra HBM pass);
    the MXU accumulates in f32; bias + ReLU in f32; store bf16.
    """
    x = x_ref[...].astype(jnp.bfloat16)
    acc = jnp.dot(x, w_ref[...], preferred_element_type=jnp.float32)
    o_ref[...] = jnp.maximum(acc + b_ref[...], 0.0).astype(o_ref.dtype)


def encode_frames(frames, w, b, *, tm_max=256):
    """frames: (N, K) f32, w: (K, D_pad) bf16, b: (1, D_pad) f32.

    Returns the padded (n_pad, D_pad) bf16 block = relu(frames @ w + b);
    the caller un-pads / upcasts in one fused op.  D_pad must be a multiple
    of 128 (lane-dense stores); K is kept whole per tile (weight resident).
    """
    N, K = frames.shape
    Kw, Dp = w.shape
    assert K == Kw and Dp % 128 == 0

    tm = _pick_tm(N, tm_max)
    n_pad = _round_up(N, tm)
    if n_pad != N:
        frames = jnp.pad(frames, ((0, n_pad - N), (0, 0)))

    const_buf = pl.Buffered(1)  # index_map is constant: second buffer never refilled

    out = pl.pallas_call(
        linear_relu_kernel,
        out_shape=jax.ShapeDtypeStruct((n_pad, Dp), jnp.bfloat16),
        grid_spec=pl.GridSpec(
            grid=(n_pad // tm,),
            in_specs=[
                pl.BlockSpec((tm, K), lambda i: (i, 0)),                            # frame rows (streamed)
                pl.BlockSpec((K, Dp), lambda i: (0, 0), pipeline_mode=const_buf),   # whole weight, resident
                pl.BlockSpec((1, Dp), lambda i: (0, 0), pipeline_mode=const_buf),   # bias (broadcast)
            ],
            out_specs=pl.BlockSpec((tm, Dp), lambda i: (i, 0)),
        ),
        compiler_params=pltpu.CompilerParams(
            dimension_semantics=("parallel",),
            vmem_limit_bytes=_vmem_limit_bytes(tm, K, Dp),
        ),
    )(frames, w, b)
    return out


def image_to_video_encoder(video, w, b):
    """video: (B, T, C, H, W) f32, w: (K, D) f32, b: (1, D) f32 -> (B, T, D) f32."""
    assert video.ndim == 5
    B, T, C, H, W = video.shape
    K, D = w.shape
    assert K == C * H * W

    # Mirrors .flatten(0, 1) plus the encoder's per-frame flatten.  Frames stay
    # f32 — the bf16 cast happens inside the kernel (no standalone cast pass).
    frames = video.reshape(B * T, K)

    # Zero-pad D to a multiple of 128 for lane-dense output stores; the weight
    # is tiny and cast/padded once.
    Dp = _round_up(D, 128)
    w_p = jnp.pad(w.astype(jnp.bfloat16), ((0, 0), (0, Dp - D)))
    b_p = jnp.pad(b.astype(jnp.float32), ((0, 0), (0, Dp - D)))

    feats = encode_frames(frames, w_p, b_p)            # (n_pad, Dp) bf16
    # Single fused consumer op: drop padded rows/cols, upcast, and apply the
    # .view(B, T, features.size(1)) of the torch wrapper.
    return feats[: B * T, :D].astype(jnp.float32).reshape(B, T, D)


if __name__ == "__main__":
    # Small shapes consistent with the forward pass.
    B, T, C, H, W = 2, 8, 4, 16, 16
    D = 32                      # encoder feature dim
    K = C * H * W               # 1024

    key = jax.random.PRNGKey(0)
    k_video, k_w, k_b = jax.random.split(key, 3)

    video = jax.random.normal(k_video, (B, T, C, H, W), dtype=jnp.float32)
    # Deterministic synthetic encoder parameters (Linear(K, D)).
    w = jax.random.normal(k_w, (K, D), dtype=jnp.float32) * (1.0 / jnp.sqrt(K))
    b = jax.random.normal(k_b, (1, D), dtype=jnp.float32) * 0.01

    fn = jax.jit(image_to_video_encoder)
    out = jax.block_until_ready(fn(video, w, b))

    # Pure-JAX reference mirroring the kernel numerics: bf16 matmul inputs,
    # exact f32 products/sums, f32 bias + relu, bf16 store, f32 view.
    frames_ref = video.reshape(B * T, K).astype(jnp.bfloat16).astype(jnp.float32)
    w_ref = w.astype(jnp.bfloat16).astype(jnp.float32)
    ref = (
        jnp.maximum(
            jnp.dot(frames_ref, w_ref, precision=jax.lax.Precision.HIGHEST) + b, 0.0
        )
        .astype(jnp.bfloat16)
        .astype(jnp.float32)
        .reshape(B, T, D)
    )

    assert out.shape == (B, T, D)
    assert out.dtype == jnp.float32
    assert jnp.allclose(out, ref, atol=1e-2, rtol=1e-2), float(
        jnp.max(jnp.abs(out - ref))
    )

    print("KERNEL_OK")
</pallas_src>

<mosaic_0001>
module attributes {stable_mosaic.version = 11 : i64} {
  func.func @linear_relu_kernel(%arg0: i32, %arg1: memref<8x1024xf32, #tpu.memory_space<vmem>>, %arg2: memref<1024x128xbf16, #tpu.memory_space<vmem>>, %arg3: memref<1x128xf32, #tpu.memory_space<vmem>>, %arg4: memref<8x128xbf16, #tpu.memory_space<vmem>>) attributes {dimension_semantics = [#tpu.dimension_semantics<parallel>], iteration_bounds = array<i64: 2>, scalar_prefetch = 0 : i64, scratch_operands = 0 : i64, tpu.core_type = #tpu.core_type<tc>, window_params = [{transform_indices = @transform_0, window_bounds = array<i64: 8, 1024>}, {pipeline_mode = #tpu.pipeline_mode<synchronous>, transform_indices = @transform_1, window_bounds = array<i64: 1024, 128>}, {pipeline_mode = #tpu.pipeline_mode<synchronous>, transform_indices = @transform_2, window_bounds = array<i64: 1, 128>}, {transform_indices = @transform_3, window_bounds = array<i64: 8, 128>}]} {
    %c0 = arith.constant 0 : index
    %c0_0 = arith.constant 0 : index
    %0 = vector.load %arg1[%c0, %c0_0] : memref<8x1024xf32, #tpu.memory_space<vmem>>, vector<8x1024xf32>
    %1 = arith.truncf %0 : vector<8x1024xf32> to vector<8x1024xbf16>
    %c0_1 = arith.constant 0 : index
    %c0_2 = arith.constant 0 : index
    %2 = vector.load %arg2[%c0_1, %c0_2] : memref<1024x128xbf16, #tpu.memory_space<vmem>>, vector<1024x128xbf16>
    %cst = arith.constant dense<0.000000e+00> : vector<8x128xf32>
    %3 = tpu.matmul %1, %2, %cst {dimension_numbers = #tpu.dot_dimension_numbers<[1], [0], [0], [1], [0, 0, 1, 1], [], []>} : vector<8x1024xbf16>, vector<1024x128xbf16>, vector<8x128xf32> -> vector<8x128xf32>
    %c0_3 = arith.constant 0 : index
    %c0_4 = arith.constant 0 : index
    %4 = vector.load %arg3[%c0_3, %c0_4] : memref<1x128xf32, #tpu.memory_space<vmem>>, vector<1x128xf32>
    %5 = vector.broadcast %4 : vector<1x128xf32> to vector<8x128xf32>
    %6 = arith.addf %3, %5 : vector<8x128xf32>
    %cst_5 = arith.constant 0.000000e+00 : f32
    %7 = vector.broadcast %cst_5 : f32 to vector<8x128xf32>
    %8 = arith.maximumf %6, %7 : vector<8x128xf32>
    %9 = arith.truncf %8 : vector<8x128xf32> to vector<8x128xbf16>
    %c0_6 = arith.constant 0 : index
    %c0_7 = arith.constant 0 : index
    %10 = vector.load %arg4[%c0_6, %c0_7] : memref<8x128xbf16, #tpu.memory_space<vmem>>, vector<8x128xbf16>
    tpu.vector_store %arg4[%c0_6, %c0_7], %9 {strides = array<i32>} : memref<8x128xbf16, #tpu.memory_space<vmem>>, vector<8x128xbf16>,
    return
  }
  func.func @transform_0(%arg0: i32) -> (i32, i32) {
    %c0_i32 = arith.constant 0 : i32
    %c0_i32_0 = arith.constant 0 : i32
    return %arg0, %c0_i32 : i32, i32
  }
  func.func @transform_1(%arg0: i32) -> (i32, i32) {
    %c0_i32 = arith.constant 0 : i32
    %c0_i32_0 = arith.constant 0 : i32
    %c0_i32_1 = arith.constant 0 : i32
    return %c0_i32, %c0_i32_0 : i32, i32
  }
  func.func @transform_2(%arg0: i32) -> (i32, i32) {
    %c0_i32 = arith.constant 0 : i32
    %c0_i32_0 = arith.constant 0 : i32
    %c0_i32_1 = arith.constant 0 : i32
    return %c0_i32, %c0_i32_0 : i32, i32
  }
  func.func @transform_3(%arg0: i32) -> (i32, i32) {
    %c0_i32 = arith.constant 0 : i32
    %c0_i32_0 = arith.constant 0 : i32
    return %arg0, %c0_i32 : i32, i32
  }
}

</mosaic_0001>

<llo_original>
// kernel: image_to_video_encoder.1
$region0: #{image_to_video_encoder.1}
  #allocation0 [shape = 'u32[]', space=smem, size = 0x4, offset = 0x4, fixed_abs, tag = 'smem constant byte address 0x4 - core index']
  #allocation1 [shape = 'u32[72,128]{1,0:T(1,128)}', space=vmem, size = 0x9000, scoped, tag = 'internal scratch']
  %s0 = inlined_call_operand.vmem [shape: f32[16,1024], index: 0, kind: input, shape index: {}]
  %s1 = inlined_call_operand.vmem [shape: bf16[1024,128], index: 1, kind: input, shape index: {}]
  %s2 = inlined_call_operand.vmem [shape: f32[1,128], index: 2, kind: input, shape index: {}]
  %s3 = inlined_call_operand.vmem [shape: bf16[16,128], index: 3, kind: output, shape index: {}]
  %s4 = sld [smem:[#allocation0]]
  $region45: #{image_to_video_encoder.1} parent=0
    _
  %s6 = ssub.s32 1, %s4
  %s7 = scalar_select 0, %s6, %s4
  loop: start=0, step=1, limit=4
  $region2: #{image_to_video_encoder.1} parent=0 // loop_pre_header
    _
  $region3: #{image_to_video_encoder.1} parent=0 // loop_header
    %s9 = sphi 0, %s13
    %p10 = scmp.ge.s32.totalorder %s9, 4
    %s19 = sphi 0, %s21
    %s22 = sphi 0, %s19
    %s23 = sphi 0, %s22
    %s39 = sphi 0, %s23
    %s43 = sphi 0, %s43
    %s45 = sphi 0, %s43
    %s46 = sphi 0, %s45
    %s60 = sphi 0, %s46
    %s64 = sphi 0, %s64
    %s66 = sphi 0, %s64
    %s67 = sphi 0, %s66
    %s81 = sphi 0, %s67
    %s87 = sphi 0, %s89
    %s90 = sphi 0, %s87
    %s91 = sphi 0, %s90
    %s107 = sphi 0, %s91
  $region4: #{image_to_video_encoder.1} parent=0 // loop_header_branch
    %12 = sbr.rel (%p10) target = $region8
  $region5: #{image_to_video_encoder.1} parent=0 // loop_body
    %s14 = ssub.s32 %s9, 1
    %s15 = ssub.s32 %s9, 2
    %s16 = sadd.s32 %s9, 1
    %s17 = ssub.s32 %s9, %s16
    %p18 = scmp.eq.s32.totalorder %s17, 0
    %s20 = sadd.s32 %s19, 1
    %s21 = scalar_select %p18, %s19, %s20
    %p24 = pneg %p18
    %p25 = scmp.eq.s32.totalorder %s9, 1
    %p26 = por %p24, %p25
    %p27 = scmp.ne.s32.totalorder %s19, %s22
    %p28 = scmp.eq.s32.totalorder %s9, 0
    %p29 = por %p27, %p28
    %p30 = scmp.ne.s32.totalorder %s19, %s22
    %p31 = scmp.eq.s32.totalorder %s14, 1
    %p32 = por %p30, %p31
    %p33 = scmp.ne.s32.totalorder %s22, %s23
    %p34 = scmp.eq.s32.totalorder %s14, 0
    %p35 = por %p33, %p34
    %p36 = scmp.ne.s32.totalorder %s22, %s23
    %p37 = scmp.eq.s32.totalorder %s15, 1
    %p38 = por %p36, %p37
    %p40 = scmp.ne.s32.totalorder %s23, %s39
    %p41 = scmp.eq.s32.totalorder %s15, 0
    %p42 = por %p40, %p41
    %s44 = sadd.s32 %s43, 1
    %p47 = scmp.eq.s32.totalorder %s9, 1
    %p48 = scmp.ne.s32.totalorder %s43, %s45
    %p49 = scmp.eq.s32.totalorder %s9, 0
    %p50 = por %p48, %p49
    %p51 = scmp.ne.s32.totalorder %s43, %s45
    %p52 = scmp.eq.s32.totalorder %s14, 1
    %p53 = por %p51, %p52
    %p54 = scmp.ne.s32.totalorder %s45, %s46
    %p55 = scmp.eq.s32.totalorder %s14, 0
    %p56 = por %p54, %p55
    %p57 = scmp.ne.s32.totalorder %s45, %s46
    %p58 = scmp.eq.s32.totalorder %s15, 1
    %p59 = por %p57, %p58
    %p61 = scmp.ne.s32.totalorder %s46, %s60
    %p62 = scmp.eq.s32.totalorder %s15, 0
    %p63 = por %p61, %p62
    %s65 = sadd.s32 %s64, 1
    %p68 = scmp.eq.s32.totalorder %s9, 1
    %p69 = scmp.ne.s32.totalorder %s64, %s66
    %p70 = scmp.eq.s32.totalorder %s9, 0
    %p71 = por %p69, %p70
    %p72 = scmp.ne.s32.totalorder %s64, %s66
    %p73 = scmp.eq.s32.totalorder %s14, 1
    %p74 = por %p72, %p73
    %p75 = scmp.ne.s32.totalorder %s66, %s67
    %p76 = scmp.eq.s32.totalorder %s14, 0
    %p77 = por %p75, %p76
    %p78 = scmp.ne.s32.totalorder %s66, %s67
    %p79 = scmp.eq.s32.totalorder %s15, 1
    %p80 = por %p78, %p79
    %p82 = scmp.ne.s32.totalorder %s67, %s81
    %p83 = scmp.eq.s32.totalorder %s15, 0
    %p84 = por %p82, %p83
    %s85 = ssub.s32 %s9, %s16
    %p86 = scmp.eq.s32.totalorder %s85, 0
    %s88 = sadd.s32 %s87, 1
    %s89 = scalar_select %p86, %s87, %s88
    %p92 = pneg %p86
    %p93 = scmp.eq.s32.totalorder %s9, 1
    %p94 = por %p92, %p93
    %p95 = scmp.ne.s32.totalorder %s87, %s90
    %p96 = scmp.eq.s32.totalorder %s9, 0
    %p97 = por %p95, %p96
    %p98 = scmp.ne.s32.totalorder %s87, %s90
    %p99 = scmp.eq.s32.totalorder %s14, 1
    %p100 = por %p98, %p99
    %p101 = scmp.ne.s32.totalorder %s90, %s91
    %p102 = scmp.eq.s32.totalorder %s14, 0
    %p103 = por %p101, %p102
    %p104 = scmp.ne.s32.totalorder %s90, %s91
    %p105 = scmp.eq.s32.totalorder %s15, 1
    %p106 = por %p104, %p105
    %p108 = scmp.ne.s32.totalorder %s91, %s107
    %p109 = scmp.eq.s32.totalorder %s15, 0
    %p110 = por %p108, %p109
    %p111 = scmp.le.s32.totalorder 1, %s9
    %p112 = scmp.lt.s32.totalorder %s9, 3
    %p113 = pnand %p111, %p112
    %p114 = pneg %p113
    // Predicated region
    $region9: #{image_to_video_encoder.1} parent=5 // pred_check
      _
    $region10: #{image_to_video_encoder.1} parent=5 // pred_check_branch
      %116 = sbr.rel (%p113) target = $region12
    $region11: #{image_to_video_encoder.1} parent=5 // pred_region
      %s117 = ssub.s32 %s9, 1
      // Predicated region
      $region13: #{image_to_video_encoder.1} parent=11 // pred_check
        %p118 = pneg %p56
      $region14: #{image_to_video_encoder.1} parent=11 // pred_check_branch
        %120 = sbr.rel (%p118) target = $region16
      $region15: #{image_to_video_encoder.1} parent=11 // pred_region
        _
      $region16: #{image_to_video_encoder.1} parent=11 // pred_fallthru
        _
      // Predicated region
      $region17: #{image_to_video_encoder.1} parent=11 // pred_check
        %p121 = pneg %p77
      $region18: #{image_to_video_encoder.1} parent=11 // pred_check_branch
        %123 = sbr.rel (%p121) target = $region20
      $region19: #{image_to_video_encoder.1} parent=11 // pred_region
        _
      $region20: #{image_to_video_encoder.1} parent=11 // pred_fallthru
        _
    $region12: #{image_to_video_encoder.1} parent=5 // pred_fallthru
      _
    %p124 = scmp.lt.s32.totalorder %s9, 2
    // Predicated region
    $region21: #{image_to_video_encoder.1} parent=5 // pred_check
      %p125 = pneg %p124
    $region22: #{image_to_video_encoder.1} parent=5 // pred_check_branch
      %127 = sbr.rel (%p125) target = $region24
    $region23: #{image_to_video_encoder.1} parent=5 // pred_region
      // Predicated region
      $region25: #{image_to_video_encoder.1} parent=23 // pred_check
        %p128 = pneg %p29
      $region26: #{image_to_video_encoder.1} parent=23 // pred_check_branch
        %130 = sbr.rel (%p128) target = $region28
      $region27: #{image_to_video_encoder.1} parent=23 // pred_region
        %p131 = scmp.lt.s32.totalorder %s9, 1
        %s132 = scalar_select %p131, %s9, 1
        %s133 = smul.addr %s132, 8
        %s134 = smul.addr %s133, 8
        %s135 = scalar_lea.vmem %s0, %s134
      $region28: #{image_to_video_encoder.1} parent=23 // pred_fallthru
        _
    $region24: #{image_to_video_encoder.1} parent=5 // pred_fallthru
      _
    %p136 = scmp.le.s32.totalorder 1, %s9
    %p137 = scmp.lt.s32.totalorder %s9, 3
    %p138 = pnand %p136, %p137
    %p139 = pneg %p138
    // Predicated region
    $region29: #{image_to_video_encoder.1} parent=5 // pred_check
      _
    $region30: #{image_to_video_encoder.1} parent=5 // pred_check_branch
      %141 = sbr.rel (%p138) target = $region32
    $region31: #{image_to_video_encoder.1} parent=5 // pred_region
      %s142 = ssub.s32 %s9, 1
      %p143 = scmp.lt.s32.totalorder %s14, 1
      %s144 = scalar_select %p143, %s14, 1
      %s145 = smul.addr %s144, 8
      %s146 = smul.addr %s145, 8
      %s147 = scalar_lea.vmem %s0, %s146
      %p148 = pneg %p35
      %p149 = pneg %p32
      %p150 = pneg %p56
      %p151 = pneg %p53
      %p152 = pneg %p77
      %p153 = pneg %p74
      %p154 = pneg %p103
      %p155 = pneg %p100
      %p156 = scmp.lt.s32.totalorder %s14, 1
      %s157 = scalar_select %p156, %s14, 1
      %s158 = smul.addr %s157, 4
      %s159 = scalar_lea.vmem %s3, %s158
      %p160 = scmp.lt.s32.totalorder %s14, 1
      %s161 = scalar_select %p160, %s14, 1
      %s162 = smul.addr %s161, 8
      %s163 = smul.addr %s162, 8
      %s164 = scalar_lea.vmem %s0, %s163
      %p165 = scmp.lt.s32.totalorder %s14, 1
      %s166 = scalar_select %p165, %s14, 1
      %s167 = smul.addr %s166, 4
      %s168 = scalar_lea.vmem %s3, %s167
      %v169 = vld [vmem:[%s164] sm:$0xff]
      %v170 = vld [vmem:[%s164 + $0x8] sm:$0xff]
      %v171 = vld [vmem:[%s164 + $0x10] sm:$0xff]
      %v172 = vld [vmem:[%s164 + $0x18] sm:$0xff]
      %v173 = vld [vmem:[%s164 + $0x20] sm:$0xff]
      %v174 = vld [vmem:[%s164 + $0x28] sm:$0xff]
      %v175 = vld [vmem:[%s164 + $0x30] sm:$0xff]
      %v176 = vld [vmem:[%s164 + $0x38] sm:$0xff]
      %v177 = vpack.c.bf16 %v169, %v169
      %v178 = vpack.c.bf16 %v170, %v170
      %v179 = vpack.c.bf16 %v171, %v171
      %v180 = vpack.c.bf16 %v172, %v172
      %v181 = vpack.c.bf16 %v173, %v173
      %v182 = vpack.c.bf16 %v174, %v174
      %v183 = vpack.c.bf16 %v175, %v175
      %v184 = vpack.c.bf16 %v176, %v176
      %v185 = vld [vmem:[%s1] sm:$0xf]
      %v186 = vld [vmem:[%s1 + $0x4] sm:$0xf]
      %v187 = vld [vmem:[%s1 + $0x8] sm:$0xf]
      %v188 = vld [vmem:[%s1 + $0xc] sm:$0xf]
      %v189 = vld [vmem:[%s1 + $0x10] sm:$0xf]
      %v190 = vld [vmem:[%s1 + $0x14] sm:$0xf]
      %v191 = vld [vmem:[%s1 + $0x18] sm:$0xf]
      %v192 = vld [vmem:[%s1 + $0x1c] sm:$0xf]
      %v193 = vld [vmem:[%s1 + $0x20] sm:$0xf]
      %v194 = vld [vmem:[%s1 + $0x24] sm:$0xf]
      %v195 = vld [vmem:[%s1 + $0x28] sm:$0xf]
      %v196 = vld [vmem:[%s1 + $0x2c] sm:$0xf]
      %v197 = vld [vmem:[%s1 + $0x30] sm:$0xf]
      %v198 = vld [vmem:[%s1 + $0x34] sm:$0xf]
      %v199 = vld [vmem:[%s1 + $0x38] sm:$0xf]
      %v200 = vld [vmem:[%s1 + $0x3c] sm:$0xf]
      %v201 = vld [vmem:[%s1 + $0x40] sm:$0xf]
      %v202 = vld [vmem:[%s1 + $0x44] sm:$0xf]
      %v203 = vld [vmem:[%s1 + $0x48] sm:$0xf]
      %v204 = vld [vmem:[%s1 + $0x4c] sm:$0xf]
      %v205 = vld [vmem:[%s1 + $0x50] sm:$0xf]
      %v206 = vld [vmem:[%s1 + $0x54] sm:$0xf]
      %v207 = vld [vmem:[%s1 + $0x58] sm:$0xf]
      %v208 = vld [vmem:[%s1 + $0x5c] sm:$0xf]
      %v209 = vld [vmem:[%s1 + $0x60] sm:$0xf]
      %v210 = vld [vmem:[%s1 + $0x64] sm:$0xf]
      %v211 = vld [vmem:[%s1 + $0x68] sm:$0xf]
      %v212 = vld [vmem:[%s1 + $0x6c] sm:$0xf]
      %v213 = vld [vmem:[%s1 + $0x70] sm:$0xf]
      %v214 = vld [vmem:[%s1 + $0x74] sm:$0xf]
      %v215 = vld [vmem:[%s1 + $0x78] sm:$0xf]
      %v216 = vld [vmem:[%s1 + $0x7c] sm:$0xf]
      %v217 = vld [vmem:[%s1 + $0x80] sm:$0xf]
      %v218 = vld [vmem:[%s1 + $0x84] sm:$0xf]
      %v219 = vld [vmem:[%s1 + $0x88] sm:$0xf]
      %v220 = vld [vmem:[%s1 + $0x8c] sm:$0xf]
      %v221 = vld [vmem:[%s1 + $0x90] sm:$0xf]
      %v222 = vld [vmem:[%s1 + $0x94] sm:$0xf]
      %v223 = vld [vmem:[%s1 + $0x98] sm:$0xf]
      %v224 = vld [vmem:[%s1 + $0x9c] sm:$0xf]
      %v225 = vld [vmem:[%s1 + $0xa0] sm:$0xf]
      %v226 = vld [vmem:[%s1 + $0xa4] sm:$0xf]
      %v227 = vld [vmem:[%s1 + $0xa8] sm:$0xf]
      %v228 = vld [vmem:[%s1 + $0xac] sm:$0xf]
      %v229 = vld [vmem:[%s1 + $0xb0] sm:$0xf]
      %v230 = vld [vmem:[%s1 + $0xb4] sm:$0xf]
      %v231 = vld [vmem:[%s1 + $0xb8] sm:$0xf]
      %v232 = vld [vmem:[%s1 + $0xbc] sm:$0xf]
      %v233 = vld [vmem:[%s1 + $0xc0] sm:$0xf]
      %v234 = vld [vmem:[%s1 + $0xc4] sm:$0xf]
      %v235 = vld [vmem:[%s1 + $0xc8] sm:$0xf]
      %v236 = vld [vmem:[%s1 + $0xcc] sm:$0xf]
      %v237 = vld [vmem:[%s1 + $0xd0] sm:$0xf]
      %v238 = vld [vmem:[%s1 + $0xd4] sm:$0xf]
      %v239 = vld [vmem:[%s1 + $0xd8] sm:$0xf]
      %v240 = vld [vmem:[%s1 + $0xdc] sm:$0xf]
      %v241 = vld [vmem:[%s1 + $0xe0] sm:$0xf]
      %v242 = vld [vmem:[%s1 + $0xe4] sm:$0xf]
      %v243 = vld [vmem:[%s1 + $0xe8] sm:$0xf]
      %v244 = vld [vmem:[%s1 + $0xec] sm:$0xf]
      %v245 = vld [vmem:[%s1 + $0xf0] sm:$0xf]
      %v246 = vld [vmem:[%s1 + $0xf4] sm:$0xf]
      %v247 = vld [vmem:[%s1 + $0xf8] sm:$0xf]
      %v248 = vld [vmem:[%s1 + $0xfc] sm:$0xf]
      %v249 = vld [vmem:[%s1 + $0x100] sm:$0xf]
      %v250 = vld [vmem:[%s1 + $0x104] sm:$0xf]
      %v251 = vld [vmem:[%s1 + $0x108] sm:$0xf]
      %v252 = vld [vmem:[%s1 + $0x10c] sm:$0xf]
      %v253 = vld [vmem:[%s1 + $0x110] sm:$0xf]
      %v254 = vld [vmem:[%s1 + $0x114] sm:$0xf]
      %v255 = vld [vmem:[%s1 + $0x118] sm:$0xf]
      %v256 = vld [vmem:[%s1 + $0x11c] sm:$0xf]
      %v257 = vld [vmem:[%s1 + $0x120] sm:$0xf]
      %v258 = vld [vmem:[%s1 + $0x124] sm:$0xf]
      %v259 = vld [vmem:[%s1 + $0x128] sm:$0xf]
      %v260 = vld [vmem:[%s1 + $0x12c] sm:$0xf]
      %v261 = vld [vmem:[%s1 + $0x130] sm:$0xf]
      %v262 = vld [vmem:[%s1 + $0x134] sm:$0xf]
      %v263 = vld [vmem:[%s1 + $0x138] sm:$0xf]
      %v264 = vld [vmem:[%s1 + $0x13c] sm:$0xf]
      %v265 = vld [vmem:[%s1 + $0x140] sm:$0xf]
      %v266 = vld [vmem:[%s1 + $0x144] sm:$0xf]
      %v267 = vld [vmem:[%s1 + $0x148] sm:$0xf]
      %v268 = vld [vmem:[%s1 + $0x14c] sm:$0xf]
      %v269 = vld [vmem:[%s1 + $0x150] sm:$0xf]
      %v270 = vld [vmem:[%s1 + $0x154] sm:$0xf]
      %v271 = vld [vmem:[%s1 + $0x158] sm:$0xf]
      %v272 = vld [vmem:[%s1 + $0x15c] sm:$0xf]
      %v273 = vld [vmem:[%s1 + $0x160] sm:$0xf]
      %v274 = vld [vmem:[%s1 + $0x164] sm:$0xf]
      %v275 = vld [vmem:[%s1 + $0x168] sm:$0xf]
      %v276 = vld [vmem:[%s1 + $0x16c] sm:$0xf]
      %v277 = vld [vmem:[%s1 + $0x170] sm:$0xf]
      %v278 = vld [vmem:[%s1 + $0x174] sm:$0xf]
      %v279 = vld [vmem:[%s1 + $0x178] sm:$0xf]
      %v280 = vld [vmem:[%s1 + $0x17c] sm:$0xf]
      %v281 = vld [vmem:[%s1 + $0x180] sm:$0xf]
      %v282 = vld [vmem:[%s1 + $0x184] sm:$0xf]
      %v283 = vld [vmem:[%s1 + $0x188] sm:$0xf]
      %v284 = vld [vmem:[%s1 + $0x18c] sm:$0xf]
      %v285 = vld [vmem:[%s1 + $0x190] sm:$0xf]
      %v286 = vld [vmem:[%s1 + $0x194] sm:$0xf]
      %v287 = vld [vmem:[%s1 + $0x198] sm:$0xf]
      %v288 = vld [vmem:[%s1 + $0x19c] sm:$0xf]
      %v289 = vld [vmem:[%s1 + $0x1a0] sm:$0xf]
      %v290 = vld [vmem:[%s1 + $0x1a4] sm:$0xf]
      %v291 = vld [vmem:[%s1 + $0x1a8] sm:$0xf]
      %v292 = vld [vmem:[%s1 + $0x1ac] sm:$0xf]
      %v293 = vld [vmem:[%s1 + $0x1b0] sm:$0xf]
      %v294 = vld [vmem:[%s1 + $0x1b4] sm:$0xf]
      %v295 = vld [vmem:[%s1 + $0x1b8] sm:$0xf]
      %v296 = vld [vmem:[%s1 + $0x1bc] sm:$0xf]
      %v297 = vld [vmem:[%s1 + $0x1c0] sm:$0xf]
      %v298 = vld [vmem:[%s1 + $0x1c4] sm:$0xf]
      %v299 = vld [vmem:[%s1 + $0x1c8] sm:$0xf]
      %v300 = vld [vmem:[%s1 + $0x1cc] sm:$0xf]
      %v301 = vld [vmem:[%s1 + $0x1d0] sm:$0xf]
      %v302 = vld [vmem:[%s1 + $0x1d4] sm:$0xf]
      %v303 = vld [vmem:[%s1 + $0x1d8] sm:$0xf]
      %v304 = vld [vmem:[%s1 + $0x1dc] sm:$0xf]
      %v305 = vld [vmem:[%s1 + $0x1e0] sm:$0xf]
      %v306 = vld [vmem:[%s1 + $0x1e4] sm:$0xf]
      %v307 = vld [vmem:[%s1 + $0x1e8] sm:$0xf]
      %v308 = vld [vmem:[%s1 + $0x1ec] sm:$0xf]
      %v309 = vld [vmem:[%s1 + $0x1f0] sm:$0xf]
      %v310 = vld [vmem:[%s1 + $0x1f4] sm:$0xf]
      %v311 = vld [vmem:[%s1 + $0x1f8] sm:$0xf]
      %v312 = vld [vmem:[%s1 + $0x1fc] sm:$0xf]
      %v313 = vld [vmem:[%s2] sm:$0x1]
      %v315 = vperm.slane %v313, 0
      %v445 = vunpack.c.l.b16 %v185
      %v446 = vunpack.c.l.b16 %v186
      %v447 = vunpack.c.l.b16 %v187
      %v448 = vunpack.c.l.b16 %v188
      %v449 = vunpack.c.l.b16 %v189
      %v450 = vunpack.c.l.b16 %v190
      %v451 = vunpack.c.l.b16 %v191
      %v452 = vunpack.c.l.b16 %v192
      %v453 = vunpack.c.l.b16 %v193
      %v454 = vunpack.c.l.b16 %v194
      %v455 = vunpack.c.l.b16 %v195
      %v456 = vunpack.c.l.b16 %v196
      %v457 = vunpack.c.l.b16 %v197
      %v458 = vunpack.c.l.b16 %v198
      %v459 = vunpack.c.l.b16 %v199
      %v460 = vunpack.c.l.b16 %v200
      %v461 = vunpack.c.l.b16 %v201
      %v462 = vunpack.c.l.b16 %v202
      %v463 = vunpack.c.l.b16 %v203
      %v464 = vunpack.c.l.b16 %v204
      %v465 = vunpack.c.l.b16 %v205
      %v466 = vunpack.c.l.b16 %v206
      %v467 = vunpack.c.l.b16 %v207
      %v468 = vunpack.c.l.b16 %v208
      %v469 = vunpack.c.l.b16 %v209
      %v470 = vunpack.c.l.b16 %v210
      %v471 = vunpack.c.l.b16 %v211
      %v472 = vunpack.c.l.b16 %v212
      %v473 = vunpack.c.l.b16 %v213
      %v474 = vunpack.c.l.b16 %v214
      %v475 = vunpack.c.l.b16 %v215
      %v476 = vunpack.c.l.b16 %v216
      %v477 = vunpack.c.l.b16 %v217
      %v478 = vunpack.c.l.b16 %v218
      %v479 = vunpack.c.l.b16 %v219
      %v480 = vunpack.c.l.b16 %v220
      %v481 = vunpack.c.l.b16 %v221
      %v482 = vunpack.c.l.b16 %v222
      %v483 = vunpack.c.l.b16 %v223
      %v484 = vunpack.c.l.b16 %v224
      %v485 = vunpack.c.l.b16 %v225
      %v486 = vunpack.c.l.b16 %v226
      %v487 = vunpack.c.l.b16 %v227
      %v488 = vunpack.c.l.b16 %v228
      %v489 = vunpack.c.l.b16 %v229
      %v490 = vunpack.c.l.b16 %v230
      %v491 = vunpack.c.l.b16 %v231
      %v492 = vunpack.c.l.b16 %v232
      %v493 = vunpack.c.l.b16 %v233
      %v494 = vunpack.c.l.b16 %v234
      %v495 = vunpack.c.l.b16 %v235
      %v496 = vunpack.c.l.b16 %v236
      %v497 = vunpack.c.l.b16 %v237
      %v498 = vunpack.c.l.b16 %v238
      %v499 = vunpack.c.l.b16 %v239
      %v500 = vunpack.c.l.b16 %v240
      %v501 = vunpack.c.l.b16 %v241
      %v502 = vunpack.c.l.b16 %v242
      %v503 = vunpack.c.l.b16 %v243
      %v504 = vunpack.c.l.b16 %v244
      %v505 = vunpack.c.l.b16 %v245
      %v506 = vunpack.c.l.b16 %v246
      %v507 = vunpack.c.l.b16 %v247
      %v508 = vunpack.c.l.b16 %v248
      %v509 = vunpack.c.l.b16 %v249
      %v510 = vunpack.c.l.b16 %v250
      %v511 = vunpack.c.l.b16 %v251
      %v512 = vunpack.c.l.b16 %v252
      %v513 = vunpack.c.l.b16 %v253
      %v514 = vunpack.c.l.b16 %v254
      %v515 = vunpack.c.l.b16 %v255
      %v516 = vunpack.c.l.b16 %v256
      %v517 = vunpack.c.l.b16 %v257
      %v518 = vunpack.c.l.b16 %v258
      %v519 = vunpack.c.l.b16 %v259
      %v520 = vunpack.c.l.b16 %v260
      %v521 = vunpack.c.l.b16 %v261
      %v522 = vunpack.c.l.b16 %v262
      %v523 = vunpack.c.l.b16 %v263
      %v524 = vunpack.c.l.b16 %v264
      %v525 = vunpack.c.l.b16 %v265
      %v526 = vunpack.c.l.b16 %v266
      %v527 = vunpack.c.l.b16 %v267
      %v528 = vunpack.c.l.b16 %v268
      %v529 = vunpack.c.l.b16 %v269
      %v530 = vunpack.c.l.b16 %v270
      %v531 = vunpack.c.l.b16 %v271
      %v532 = vunpack.c.l.b16 %v272
      %v533 = vunpack.c.l.b16 %v273
      %v534 = vunpack.c.l.b16 %v274
      %v535 = vunpack.c.l.b16 %v275
      %v536 = vunpack.c.l.b16 %v276
      %v537 = vunpack.c.l.b16 %v277
      %v538 = vunpack.c.l.b16 %v278
      %v539 = vunpack.c.l.b16 %v279
      %v540 = vunpack.c.l.b16 %v280
      %v541 = vunpack.c.l.b16 %v281
      %v542 = vunpack.c.l.b16 %v282
      %v543 = vunpack.c.l.b16 %v283
      %v544 = vunpack.c.l.b16 %v284
      %v545 = vunpack.c.l.b16 %v285
      %v546 = vunpack.c.l.b16 %v286
      %v547 = vunpack.c.l.b16 %v287
      %v548 = vunpack.c.l.b16 %v288
      %v549 = vunpack.c.l.b16 %v289
      %v550 = vunpack.c.l.b16 %v290
      %v551 = vunpack.c.l.b16 %v291
      %v552 = vunpack.c.l.b16 %v292
      %v553 = vunpack.c.l.b16 %v293
      %v554 = vunpack.c.l.b16 %v294
      %v555 = vunpack.c.l.b16 %v295
      %v556 = vunpack.c.l.b16 %v296
      %v557 = vunpack.c.l.b16 %v297
      %v558 = vunpack.c.l.b16 %v298
      %v559 = vunpack.c.l.b16 %v299
      %v560 = vunpack.c.l.b16 %v300
      %v561 = vunpack.c.l.b16 %v301
      %v562 = vunpack.c.l.b16 %v302
      %v563 = vunpack.c.l.b16 %v303
      %v564 = vunpack.c.l.b16 %v304
      %v565 = vunpack.c.l.b16 %v305
      %v566 = vunpack.c.l.b16 %v306
      %v567 = vunpack.c.l.b16 %v307
      %v568 = vunpack.c.l.b16 %v308
      %v569 = vunpack.c.l.b16 %v309
      %v570 = vunpack.c.l.b16 %v310
      %v571 = vunpack.c.l.b16 %v311
      %v572 = vunpack.c.l.b16 %v312
      %v573 = vpack.c.b16 %v446, %v445
      %v574 = vpack.c.b16 %v448, %v447
      %v575 = vpack.c.b16 %v450, %v449
      %v576 = vpack.c.b16 %v452, %v451
      %v577 = vpack.c.b16 %v454, %v453
      %v578 = vpack.c.b16 %v456, %v455
      %v579 = vpack.c.b16 %v458, %v457
      %v580 = vpack.c.b16 %v460, %v459
      %v581 = vpack.c.b16 %v462, %v461
      %v582 = vpack.c.b16 %v464, %v463
      %v583 = vpack.c.b16 %v466, %v465
      %v584 = vpack.c.b16 %v468, %v467
      %v585 = vpack.c.b16 %v470, %v469
      %v586 = vpack.c.b16 %v472, %v471
      %v587 = vpack.c.b16 %v474, %v473
      %v588 = vpack.c.b16 %v476, %v475
      %v589 = vpack.c.b16 %v478, %v477
      %v590 = vpack.c.b16 %v480, %v479
      %v591 = vpack.c.b16 %v482, %v481
      %v592 = vpack.c.b16 %v484, %v483
      %v593 = vpack.c.b16 %v486, %v485
      %v594 = vpack.c.b16 %v488, %v487
      %v595 = vpack.c.b16 %v490, %v489
      %v596 = vpack.c.b16 %v492, %v491
      %v597 = vpack.c.b16 %v494, %v493
      %v598 = vpack.c.b16 %v496, %v495
      %v599 = vpack.c.b16 %v498, %v497
      %v600 = vpack.c.b16 %v500, %v499
      %v601 = vpack.c.b16 %v502, %v501
      %v602 = vpack.c.b16 %v504, %v503
      %v603 = vpack.c.b16 %v506, %v505
      %v604 = vpack.c.b16 %v508, %v507
      %v605 = vpack.c.b16 %v510, %v509
      %v606 = vpack.c.b16 %v512, %v511
      %v607 = vpack.c.b16 %v514, %v513
      %v608 = vpack.c.b16 %v516, %v515
      %v609 = vpack.c.b16 %v518, %v517
      %v610 = vpack.c.b16 %v520, %v519
      %v611 = vpack.c.b16 %v522, %v521
      %v612 = vpack.c.b16 %v524, %v523
      %v613 = vpack.c.b16 %v526, %v525
      %v614 = vpack.c.b16 %v528, %v527
      %v615 = vpack.c.b16 %v530, %v529
      %v616 = vpack.c.b16 %v532, %v531
      %v617 = vpack.c.b16 %v534, %v533
      %v618 = vpack.c.b16 %v536, %v535
      %v619 = vpack.c.b16 %v538, %v537
      %v620 = vpack.c.b16 %v540, %v539
      %v621 = vpack.c.b16 %v542, %v541
      %v622 = vpack.c.b16 %v544, %v543
      %v623 = vpack.c.b16 %v546, %v545
      %v624 = vpack.c.b16 %v548, %v547
      %v625 = vpack.c.b16 %v550, %v549
      %v626 = vpack.c.b16 %v552, %v551
      %v627 = vpack.c.b16 %v554, %v553
      %v628 = vpack.c.b16 %v556, %v555
      %v629 = vpack.c.b16 %v558, %v557
      %v630 = vpack.c.b16 %v560, %v559
      %v631 = vpack.c.b16 %v562, %v561
      %v632 = vpack.c.b16 %v564, %v563
      %v633 = vpack.c.b16 %v566, %v565
      %v634 = vpack.c.b16 %v568, %v567
      %v635 = vpack.c.b16 %v570, %v569
      %v636 = vpack.c.b16 %v572, %v571
      %701 = vmatpush.bf16.msra.mxu0 %v580
      %702 = vmatpush.bf16.msra.mxu0 %v579
      %703 = vmatpush.bf16.msra.mxu0 %v578
      %704 = vmatpush.bf16.msra.mxu0 %v577
      %705 = vmatpush.bf16.msra.mxu0 %v576
      %706 = vmatpush.bf16.msra.mxu0 %v575
      %707 = vmatpush.bf16.msra.mxu0 %v574
      %708 = vmatpush.bf16.msra.mxu0 %v573
      %709 = vmatmul.bf16.gmra.mxu0 %v177
      %v710 = vpop.f32.mrf.mxu0
      %v711 = vadd.f32 %v315, %v710
      %v712 = vpop.f32.mrf.mxu0
      %713 = vdwg.mxu0
      %714 = vmatpush.bf16.msra.mxu0 %v588
      %715 = vmatpush.bf16.msra.mxu0 %v587
      %716 = vmatpush.bf16.msra.mxu0 %v586
      %717 = vmatpush.bf16.msra.mxu0 %v585
      %718 = vmatpush.bf16.msra.mxu0 %v584
      %719 = vmatpush.bf16.msra.mxu0 %v583
      %720 = vmatpush.bf16.msra.mxu0 %v582
      %721 = vmatpush.bf16.msra.mxu0 %v581
      %722 = vmatmul.bf16.gmra.mxu0 %v178
      %v723 = vpop.f32.mrf.mxu0
      %v724 = vadd.f32 %v711, %v723
      %v725 = vpop.f32.mrf.mxu0
      %726 = vdwg.mxu0
      %727 = vmatpush.bf16.msra.mxu0 %v596
      %728 = vmatpush.bf16.msra.mxu0 %v595
      %729 = vmatpush.bf16.msra.mxu0 %v594
      %730 = vmatpush.bf16.msra.mxu0 %v593
      %731 = vmatpush.bf16.msra.mxu0 %v592
      %732 = vmatpush.bf16.msra.mxu0 %v591
      %733 = vmatpush.bf16.msra.mxu0 %v590
      %734 = vmatpush.bf16.msra.mxu0 %v589
      %735 = vmatmul.bf16.gmra.mxu0 %v179
      %v736 = vpop.f32.mrf.mxu0
      %v737 = vadd.f32 %v724, %v736
      %v738 = vpop.f32.mrf.mxu0
      %739 = vdwg.mxu0
      %740 = vmatpush.bf16.msra.mxu0 %v604
      %741 = vmatpush.bf16.msra.mxu0 %v603
      %742 = vmatpush.bf16.msra.mxu0 %v602
      %743 = vmatpush.bf16.msra.mxu0 %v601
      %744 = vmatpush.bf16.msra.mxu0 %v600
      %745 = vmatpush.bf16.msra.mxu0 %v599
      %746 = vmatpush.bf16.msra.mxu0 %v598
      %747 = vmatpush.bf16.msra.mxu0 %v597
      %748 = vmatmul.bf16.gmra.mxu0 %v180
      %v749 = vpop.f32.mrf.mxu0
      %v750 = vadd.f32 %v737, %v749
      %v751 = vpop.f32.mrf.mxu0
      %752 = vdwg.mxu0
      %753 = vmatpush.bf16.msra.mxu0 %v612
      %754 = vmatpush.bf16.msra.mxu0 %v611
      %755 = vmatpush.bf16.msra.mxu0 %v610
      %756 = vmatpush.bf16.msra.mxu0 %v609
      %757 = vmatpush.bf16.msra.mxu0 %v608
      %758 = vmatpush.bf16.msra.mxu0 %v607
      %759 = vmatpush.bf16.msra.mxu0 %v606
      %760 = vmatpush.bf16.msra.mxu0 %v605
      %761 = vmatmul.bf16.gmra.mxu0 %v181
      %v762 = vpop.f32.mrf.mxu0
      %v763 = vadd.f32 %v750, %v762
      %v764 = vpop.f32.mrf.mxu0
      %765 = vdwg.mxu0
      %766 = vmatpush.bf16.msra.mxu0 %v620
      %767 = vmatpush.bf16.msra.mxu0 %v619
      %768 = vmatpush.bf16.msra.mxu0 %v618
      %769 = vmatpush.bf16.msra.mxu0 %v617
      %770 = vmatpush.bf16.msra.mxu0 %v616
      %771 = vmatpush.bf16.msra.mxu0 %v615
      %772 = vmatpush.bf16.msra.mxu0 %v614
      %773 = vmatpush.bf16.msra.mxu0 %v613
      %774 = vmatmul.bf16.gmra.mxu0 %v182
      %v775 = vpop.f32.mrf.mxu0
      %v776 = vadd.f32 %v763, %v775
      %v777 = vpop.f32.mrf.mxu0
      %778 = vdwg.mxu0
      %779 = vmatpush.bf16.msra.mxu0 %v628
      %780 = vmatpush.bf16.msra.mxu0 %v627
      %781 = vmatpush.bf16.msra.mxu0 %v626
      %782 = vmatpush.bf16.msra.mxu0 %v625
      %783 = vmatpush.bf16.msra.mxu0 %v624
      %784 = vmatpush.bf16.msra.mxu0 %v623
      %785 = vmatpush.bf16.msra.mxu0 %v622
      %786 = vmatpush.bf16.msra.mxu0 %v621
      %787 = vmatmul.bf16.gmra.mxu0 %v183
      %v788 = vpop.f32.mrf.mxu0
      %v789 = vadd.f32 %v776, %v788
      %v790 = vpop.f32.mrf.mxu0
      %791 = vdwg.mxu0
      %792 = vmatpush.bf16.msra.mxu0 %v636
      %793 = vmatpush.bf16.msra.mxu0 %v635
      %794 = vmatpush.bf16.msra.mxu0 %v634
      %795 = vmatpush.bf16.msra.mxu0 %v633
      %796 = vmatpush.bf16.msra.mxu0 %v632
      %797 = vmatpush.bf16.msra.mxu0 %v631
      %798 = vmatpush.bf16.msra.mxu0 %v630
      %799 = vmatpush.bf16.msra.mxu0 %v629
      %800 = vmatmul.bf16.gmra.mxu0 %v184
      %v801 = vpop.f32.mrf.mxu0
      %v802 = vadd.f32 %v789, %v801
      %v803 = vpop.f32.mrf.mxu0
      %804 = vdwg.mxu0
      %v805 = vmax.f32 %v802, 0.0
      %v806 = vpack.c.bf16 %v805, %v805
      %807 = vst [vmem:[%s168] sm:$0xf] %v806
      %p808 = scmp.lt.s32.totalorder %s14, 1
      %s809 = scalar_select %p808, %s14, 1
      %s810 = smul.addr %s809, 4
      %s811 = scalar_lea.vmem %s3, %s810
      // Predicated region
      $region33: #{image_to_video_encoder.1} parent=31 // pred_check
        %p812 = pneg %p100
      $region34: #{image_to_video_encoder.1} parent=31 // pred_check_branch
        %814 = sbr.rel (%p812) target = $region36
      $region35: #{image_to_video_encoder.1} parent=31 // pred_region
        _
      $region36: #{image_to_video_encoder.1} parent=31 // pred_fallthru
        _
    $region32: #{image_to_video_encoder.1} parent=5 // pred_fallthru
      _
    %p815 = scmp.le.s32.totalorder 2, %s9
    // Predicated region
    $region37: #{image_to_video_encoder.1} parent=5 // pred_check
      %p816 = pneg %p815
    $region38: #{image_to_video_encoder.1} parent=5 // pred_check_branch
      %818 = sbr.rel (%p816) target = $region40
    $region39: #{image_to_video_encoder.1} parent=5 // pred_region
      %s819 = ssub.s32 %s9, 2
      // Predicated region
      $region41: #{image_to_video_encoder.1} parent=39 // pred_check
        %p820 = pneg %p106
      $region42: #{image_to_video_encoder.1} parent=39 // pred_check_branch
        %822 = sbr.rel (%p820) target = $region44
      $region43: #{image_to_video_encoder.1} parent=39 // pred_region
        %p823 = scmp.lt.s32.totalorder %s15, 1
        %s824 = scalar_select %p823, %s15, 1
        %s825 = smul.addr %s824, 4
        %s826 = scalar_lea.vmem %s3, %s825
      $region44: #{image_to_video_encoder.1} parent=39 // pred_fallthru
        _
    $region40: #{image_to_video_encoder.1} parent=5 // pred_fallthru
      _
  $region6: #{image_to_video_encoder.1} parent=0 // loop_footer
    %s13 = sadd.s32 1, %s9
  $region7: #{image_to_video_encoder.1} parent=0 // loop_footer_branch
    %8 = sbr.rel target = $region3
  $region8: #{image_to_video_encoder.1} parent=0 // loop_exit
    _

</llo_original>
